<compile_context>
chip_gen: v7x
topology: tpu7x:2x2x1
jax: 0.10.0
libtpu: 0.0.40
codegen_flags: <defaults>
</compile_context>

<pallas_src>
import functools

import jax
import jax.numpy as jnp
from jax.experimental import pallas as pl
from jax.experimental.pallas import tpu as pltpu

EPS = 1e-5  # PyTorch BatchNorm1d default eps


def _round_up(x, m):
    return (x + m - 1) // m * m


@functools.lru_cache(maxsize=None)
def _vmem_capacity_bytes():
    """Per-core VMEM capacity; conservative 64 MiB fallback (v7x) if the query fails."""
    try:
        info = pltpu.get_tpu_info()
        return int(getattr(info, "vmem_capacity_bytes", 64 << 20))
    except Exception:
        return 64 << 20


def _resident_spec(shape):
    """Constant-index BlockSpec for VMEM-resident weights/biases (fetched once).

    Single-buffered (pl.Buffered(1)) so the never-refetched operands don't pay the
    default double-buffer VMEM cost; falls back to a plain BlockSpec if the running
    JAX version does not accept pipeline_mode.
    """
    index_map = lambda i: (0,) * len(shape)
    if hasattr(pl, "Buffered"):
        try:
            return pl.BlockSpec(shape, index_map, pipeline_mode=pl.Buffered(1))
        except TypeError:
            pass
    return pl.BlockSpec(shape, index_map)


# ----------------------------- kernel -----------------------------

def _resblock_kernel(x_ref, w1_ref, b1_ref, w2_ref, b2_ref, o_ref):
    """out = relu( relu(x@W1' + b1') @ W2' + b2'' + shortcut(x) ).

    Projection variant: W1' = [W1_folded | Ws]  (shape [IN_P, 2*OUT_P]) so x streams
    through the MXU exactly once; the shortcut is the second half of the product and
    the shortcut bias is pre-folded into b2''.
    Identity variant:   W1' has shape [IN_P, OUT_P]; shortcut = x.
    """
    out_p = o_ref.shape[-1]
    xb = x_ref[...]                                           # bf16 [TILE_B, IN_P]
    y = jnp.dot(xb, w1_ref[...], preferred_element_type=jnp.float32)
    h = jnp.maximum(y[:, :out_p] + b1_ref[...], 0.0)
    # TODO(synk): Dropout(0.2) is identity in eval mode; training-mode mask not implemented.
    h = jnp.dot(h.astype(jnp.bfloat16), w2_ref[...],
                preferred_element_type=jnp.float32) + b2_ref[...]
    if w1_ref.shape[-1] == 2 * out_p:      # projection shortcut, fused into the first dot
        sc = y[:, out_p:]
    else:                                  # identity shortcut (IN_P == OUT_P)
        sc = xb.astype(jnp.float32)
    o_ref[...] = jnp.maximum(h + sc, 0.0)


# -------------------------- host-side prep --------------------------

def init_params(key, in_features, out_features):
    """Deterministic PyTorch-style raw parameters (weights pre-transposed [in, out])."""
    ks = jax.random.split(key, 6)

    def linear_init(kw, kb, fan_in, fan_out):
        bound = 1.0 / jnp.sqrt(fan_in)
        w = jax.random.uniform(kw, (fan_in, fan_out), jnp.float32, -bound, bound)
        b = jax.random.uniform(kb, (fan_out,), jnp.float32, -bound, bound)
        return w, b

    w1, b1 = linear_init(ks[0], ks[1], in_features, out_features)
    w2, b2 = linear_init(ks[2], ks[3], out_features, out_features)

    ones = jnp.ones((out_features,), jnp.float32)
    zeros = jnp.zeros((out_features,), jnp.float32)
    p = dict(
        w1=w1, b1=b1, g1=ones, be1=zeros, m1=zeros, v1=ones,
        w2=w2, b2=b2, g2=ones, be2=zeros, m2=zeros, v2=ones,
    )
    if in_features != out_features:
        ws, bs = linear_init(ks[4], ks[5], in_features, out_features)
        p["ws"], p["bs"] = ws, bs
    return p


def prepare_kernel_params(p, in_features, out_features):
    """Fold eval-mode BN into the Linears, fold the shortcut bias into b2, concatenate
    W1|Ws for the projection case, and pad to lane-dense (128-multiple) bf16 tiles."""
    IN_P = _round_up(in_features, 128)
    OUT_P = _round_up(out_features, 128)

    s1 = p["g1"] / jnp.sqrt(p["v1"] + EPS)
    w1 = p["w1"] * s1[None, :]
    b1 = (p["b1"] - p["m1"]) * s1 + p["be1"]

    s2 = p["g2"] / jnp.sqrt(p["v2"] + EPS)
    w2 = p["w2"] * s2[None, :]
    b2 = (p["b2"] - p["m2"]) * s2 + p["be2"]

    def pad2(a, r, c):
        return jnp.zeros((r, c), a.dtype).at[: a.shape[0], : a.shape[1]].set(a)

    identity = "ws" not in p
    if identity:
        w1_full = pad2(w1, IN_P, OUT_P)                      # [IN_P, OUT_P]
    else:
        b2 = b2 + p["bs"]   # residual add is linear -> single epilogue bias
        w1_full = jnp.concatenate(                           # [IN_P, 2*OUT_P]
            [pad2(w1, IN_P, OUT_P), pad2(p["ws"], IN_P, OUT_P)], axis=1)

    return {
        "w1": w1_full.astype(jnp.bfloat16),
        "b1": pad2(b1[None, :], 1, OUT_P),                   # f32
        "w2": pad2(w2, OUT_P, OUT_P).astype(jnp.bfloat16),
        "b2": pad2(b2[None, :], 1, OUT_P),                   # f32
    }


# ----------------------------- wrapper -----------------------------

@functools.partial(jax.jit, static_argnames=("out_features",))
def residual_block(x, kp, out_features):
    B, in_f = x.shape
    IN_P, W1C = kp["w1"].shape            # W1C == OUT_P (identity) or 2*OUT_P (projection)
    OUT_P = kp["w2"].shape[0]

    # Cast x to bf16 once (halves streamed HBM bytes); pad only the feature dim if needed.
    xb = x.astype(jnp.bfloat16)
    if in_f != IN_P:
        xb = jnp.pad(xb, ((0, 0), (0, IN_P - in_f)))

    weight_bytes = (IN_P * W1C + OUT_P * OUT_P) * 2          # bf16, single-buffered
    bias_bytes = 2 * OUT_P * 4

    # Generation-aware batch tile (multiple of 16 for bf16 sublane packing).
    vmem_cap = _vmem_capacity_bytes()
    tile_cap = 256 if vmem_cap <= (64 << 20) else 512        # v7x: fit 64 MiB + feed both TCs
    if vmem_cap >= (128 << 20) and weight_bytes < (32 << 20) and B > 1024:
        tile_cap = 1024                                      # v5e/v6e: amortize grid-step cost
    if B <= tile_cap:
        TILE_B = B                        # single block == full batch dim (always legal)
    else:
        TILE_B = tile_cap                 # multiple of 16; ragged last block is masked
    grid = (pl.cdiv(B, TILE_B),)

    x_spec = pl.BlockSpec((TILE_B, IN_P), lambda i: (i, 0))
    o_spec = pl.BlockSpec((TILE_B, OUT_P), lambda i: (i, 0))
    in_specs = [
        x_spec,
        _resident_spec((IN_P, W1C)),
        _resident_spec((1, OUT_P)),
        _resident_spec((OUT_P, OUT_P)),
        _resident_spec((1, OUT_P)),
    ]

    # VMEM budget: single-buffered weights + double-buffered x/out + f32 intermediates,
    # capped at 85% of the physical per-core VMEM.
    io_bytes = 2 * TILE_B * IN_P * 2 + 2 * TILE_B * OUT_P * 4
    interm_bytes = TILE_B * (W1C * 4 + OUT_P * 10)
    vmem_needed = weight_bytes + bias_bytes + io_bytes + interm_bytes + (4 << 20)
    vmem_limit = int(min(max(vmem_needed, 32 << 20), int(vmem_cap * 0.85)))

    cost = pl.CostEstimate(
        flops=2 * B * (IN_P * W1C + OUT_P * OUT_P),
        transcendentals=0,
        bytes_accessed=B * IN_P * 2 + B * OUT_P * 4 + weight_bytes + bias_bytes,
    )

    out_p = pl.pallas_call(
        _resblock_kernel,
        out_shape=jax.ShapeDtypeStruct((B, OUT_P), jnp.float32),
        grid=grid,
        in_specs=in_specs,
        out_specs=o_spec,
        compiler_params=pltpu.CompilerParams(
            dimension_semantics=("parallel",),
            vmem_limit_bytes=vmem_limit,
        ),
        cost_estimate=cost,
    )(xb, kp["w1"], kp["b1"], kp["w2"], kp["b2"])

    # TODO(synk): large-feature v7x fallback (column-tiling W2/Ws with an h scratch under a
    # second grid axis) not implemented; all weights are required VMEM-resident.
    if OUT_P == out_features:
        return out_p
    return out_p[:, :out_features]


# ----------------------------- reference -----------------------------

def residual_block_ref(x, p):
    """Plain-JAX f32 reference with un-folded params (PyTorch eval-mode semantics)."""
    h = x @ p["w1"] + p["b1"]
    h = (h - p["m1"]) / jnp.sqrt(p["v1"] + EPS) * p["g1"] + p["be1"]
    h = jnp.maximum(h, 0.0)
    h = h @ p["w2"] + p["b2"]
    h = (h - p["m2"]) / jnp.sqrt(p["v2"] + EPS) * p["g2"] + p["be2"]
    sc = x @ p["ws"] + p["bs"] if "ws" in p else x
    return jnp.maximum(h + sc, 0.0)


if __name__ == "__main__":
    key = jax.random.PRNGKey(0)
    k1, k2, k3, k4 = jax.random.split(key, 4)

    # Case 1: projection shortcut (in_features != out_features)
    in_f, out_f, batch = 32, 64, 8
    x = jax.random.normal(k1, (batch, in_f), jnp.float32)
    p = init_params(k2, in_f, out_f)
    kp = prepare_kernel_params(p, in_f, out_f)
    out = jax.block_until_ready(residual_block(x, kp, out_f))
    ref = residual_block_ref(x, p)
    assert out.shape == (batch, out_f)
    assert jnp.allclose(out, ref, atol=5e-2, rtol=5e-2), "proj-shortcut mismatch vs reference"

    # Case 2: identity shortcut (in_features == out_features)
    in_f2 = out_f2 = 64
    x2 = jax.random.normal(k3, (batch, in_f2), jnp.float32)
    p2 = init_params(k4, in_f2, out_f2)
    kp2 = prepare_kernel_params(p2, in_f2, out_f2)
    out2 = jax.block_until_ready(residual_block(x2, kp2, out_f2))
    ref2 = residual_block_ref(x2, p2)
    assert out2.shape == (batch, out_f2)
    assert jnp.allclose(out2, ref2, atol=5e-2, rtol=5e-2), "identity-shortcut mismatch vs reference"

    print("KERNEL_OK")
</pallas_src>

<mosaic_0001>
module attributes {stable_mosaic.version = 11 : i64} {
  func.func @_resblock_kernel(%arg0: i32, %arg1: memref<8x128xbf16, #tpu.memory_space<vmem>>, %arg2: memref<128x256xbf16, #tpu.memory_space<vmem>>, %arg3: memref<1x128xf32, #tpu.memory_space<vmem>>, %arg4: memref<128x128xbf16, #tpu.memory_space<vmem>>, %arg5: memref<1x128xf32, #tpu.memory_space<vmem>>, %arg6: memref<8x128xf32, #tpu.memory_space<vmem>>) attributes {dimension_semantics = [#tpu.dimension_semantics<parallel>], iteration_bounds = array<i64: 1>, scalar_prefetch = 0 : i64, scratch_operands = 0 : i64, tpu.core_type = #tpu.core_type<tc>, window_params = [{transform_indices = @transform_0, window_bounds = array<i64: 8, 128>}, {pipeline_mode = #tpu.pipeline_mode<synchronous>, transform_indices = @transform_1, window_bounds = array<i64: 128, 256>}, {pipeline_mode = #tpu.pipeline_mode<synchronous>, transform_indices = @transform_2, window_bounds = array<i64: 1, 128>}, {pipeline_mode = #tpu.pipeline_mode<synchronous>, transform_indices = @transform_3, window_bounds = array<i64: 128, 128>}, {pipeline_mode = #tpu.pipeline_mode<synchronous>, transform_indices = @transform_4, window_bounds = array<i64: 1, 128>}, {transform_indices = @transform_5, window_bounds = array<i64: 8, 128>}]} {
    %c0 = arith.constant 0 : index
    %c0_0 = arith.constant 0 : index
    %0 = vector.load %arg1[%c0, %c0_0] : memref<8x128xbf16, #tpu.memory_space<vmem>>, vector<8x128xbf16>
    %c0_1 = arith.constant 0 : index
    %c0_2 = arith.constant 0 : index
    %1 = vector.load %arg2[%c0_1, %c0_2] : memref<128x256xbf16, #tpu.memory_space<vmem>>, vector<128x256xbf16>
    %cst = arith.constant dense<0.000000e+00> : vector<8x256xf32>
    %2 = tpu.matmul %0, %1, %cst {dimension_numbers = #tpu.dot_dimension_numbers<[1], [0], [0], [1], [0, 0, 1, 1], [], []>} : vector<8x128xbf16>, vector<128x256xbf16>, vector<8x256xf32> -> vector<8x256xf32>
    %3 = vector.extract_strided_slice %2 {offsets = [0, 0], sizes = [8, 128], strides = [1, 1]} : vector<8x256xf32> to vector<8x128xf32>
    %c0_3 = arith.constant 0 : index
    %c0_4 = arith.constant 0 : index
    %4 = vector.load %arg3[%c0_3, %c0_4] : memref<1x128xf32, #tpu.memory_space<vmem>>, vector<1x128xf32>
    %5 = vector.broadcast %4 : vector<1x128xf32> to vector<8x128xf32>
    %6 = arith.addf %3, %5 : vector<8x128xf32>
    %cst_5 = arith.constant 0.000000e+00 : f32
    %7 = vector.broadcast %cst_5 : f32 to vector<8x128xf32>
    %8 = arith.maximumf %6, %7 : vector<8x128xf32>
    %9 = arith.truncf %8 : vector<8x128xf32> to vector<8x128xbf16>
    %c0_6 = arith.constant 0 : index
    %c0_7 = arith.constant 0 : index
    %10 = vector.load %arg4[%c0_6, %c0_7] : memref<128x128xbf16, #tpu.memory_space<vmem>>, vector<128x128xbf16>
    %cst_8 = arith.constant dense<0.000000e+00> : vector<8x128xf32>
    %11 = tpu.matmul %9, %10, %cst_8 {dimension_numbers = #tpu.dot_dimension_numbers<[1], [0], [0], [1], [0, 0, 1, 1], [], []>} : vector<8x128xbf16>, vector<128x128xbf16>, vector<8x128xf32> -> vector<8x128xf32>
    %c0_9 = arith.constant 0 : index
    %c0_10 = arith.constant 0 : index
    %12 = vector.load %arg5[%c0_9, %c0_10] : memref<1x128xf32, #tpu.memory_space<vmem>>, vector<1x128xf32>
    %13 = vector.broadcast %12 : vector<1x128xf32> to vector<8x128xf32>
    %14 = arith.addf %11, %13 : vector<8x128xf32>
    %15 = vector.extract_strided_slice %2 {offsets = [0, 128], sizes = [8, 128], strides = [1, 1]} : vector<8x256xf32> to vector<8x128xf32>
    %16 = arith.addf %14, %15 : vector<8x128xf32>
    %cst_11 = arith.constant 0.000000e+00 : f32
    %17 = vector.broadcast %cst_11 : f32 to vector<8x128xf32>
    %18 = arith.maximumf %16, %17 : vector<8x128xf32>
    %c0_12 = arith.constant 0 : index
    %c0_13 = arith.constant 0 : index
    %19 = vector.load %arg6[%c0_12, %c0_13] : memref<8x128xf32, #tpu.memory_space<vmem>>, vector<8x128xf32>
    tpu.vector_store %arg6[%c0_12, %c0_13], %18 {strides = array<i32>} : memref<8x128xf32, #tpu.memory_space<vmem>>, vector<8x128xf32>,
    return
  }
  func.func @transform_0(%arg0: i32) -> (i32, i32) {
    %c0_i32 = arith.constant 0 : i32
    %c0_i32_0 = arith.constant 0 : i32
    return %arg0, %c0_i32 : i32, i32
  }
  func.func @transform_1(%arg0: i32) -> (i32, i32) {
    %c0_i32 = arith.constant 0 : i32
    %c0_i32_0 = arith.constant 0 : i32
    %c0_i32_1 = arith.constant 0 : i32
    return %c0_i32, %c0_i32_0 : i32, i32
  }
  func.func @transform_2(%arg0: i32) -> (i32, i32) {
    %c0_i32 = arith.constant 0 : i32
    %c0_i32_0 = arith.constant 0 : i32
    %c0_i32_1 = arith.constant 0 : i32
    return %c0_i32, %c0_i32_0 : i32, i32
  }
  func.func @transform_3(%arg0: i32) -> (i32, i32) {
    %c0_i32 = arith.constant 0 : i32
    %c0_i32_0 = arith.constant 0 : i32
    %c0_i32_1 = arith.constant 0 : i32
    return %c0_i32, %c0_i32_0 : i32, i32
  }
  func.func @transform_4(%arg0: i32) -> (i32, i32) {
    %c0_i32 = arith.constant 0 : i32
    %c0_i32_0 = arith.constant 0 : i32
    %c0_i32_1 = arith.constant 0 : i32
    return %c0_i32, %c0_i32_0 : i32, i32
  }
  func.func @transform_5(%arg0: i32) -> (i32, i32) {
    %c0_i32 = arith.constant 0 : i32
    %c0_i32_0 = arith.constant 0 : i32
    return %arg0, %c0_i32 : i32, i32
  }
}

</mosaic_0001>

<llo_original>
// kernel: residual_block.1
$region0: #{residual_block.1}
  #allocation0 [shape = 'u32[]', space=smem, size = 0x4, offset = 0x4, fixed_abs, tag = 'smem constant byte address 0x4 - core index']
  #allocation1 [shape = 'u32[144,128]{1,0:T(1,128)}', space=vmem, size = 0x12000, scoped, tag = 'internal scratch']
  %s0 = inlined_call_operand.vmem [shape: bf16[8,128], index: 0, kind: input, shape index: {}]
  %s1 = inlined_call_operand.hbm [shape: bf16[128,256], index: 1, kind: input, shape index: {}]
  %s2 = inlined_call_operand.vmem [shape: f32[1,128], index: 2, kind: input, shape index: {}]
  %s3 = inlined_call_operand.hbm [shape: bf16[128,128], index: 3, kind: input, shape index: {}]
  %s4 = inlined_call_operand.vmem [shape: f32[1,128], index: 4, kind: input, shape index: {}]
  %s5 = inlined_call_operand.hbm [shape: f32[8,128], index: 5, kind: output, shape index: {}]
  %s6 = sld [smem:[#allocation0]]
  $region38: #{residual_block.1} parent=0
    _
  %s8 = ssub.s32 1, %s6
  %s9 = scalar_select 0, %s8, %s6
  $region1: #{residual_block.1} parent=0
    #allocation2 [shape = 'u8[65536]{0}', space=vmem, size = 0x10000, scoped, tag = 'input window, operand 1, single buffered']
    #allocation3 [shape = 's32[1]{0}', space=sflag, size = 0x4, scoped, tag = 'scoped memory for residual_block.1']
    #allocation4 [shape = 's32[1]{0}', space=sflag, size = 0x4, scoped, tag = 'scoped memory for residual_block.1']
    #allocation5 [shape = 'u8[32768]{0}', space=vmem, size = 0x8000, scoped, tag = 'input window, operand 3, single buffered']
    #allocation6 [shape = 's32[1]{0}', space=sflag, size = 0x4, scoped, tag = 'scoped memory for residual_block.1']
    #allocation7 [shape = 'u8[4096]{0}', space=vmem, size = 0x1000, scoped, tag = 'output window, operand 0, single buffered']
    %10 = vsyncpa [#allocation3], 0
    %11 = vsyncpa [#allocation6], 0
    %12 = vsyncpa [#allocation4], 0
    // Predicated region
    $region2: #{residual_block.1} parent=1 // pred_check
      _
    $region3: #{residual_block.1} parent=1 // pred_check_branch
      %14 = sbr.rel (0) target = $region5
    $region4: #{residual_block.1} parent=1 // pred_region
      _
    $region5: #{residual_block.1} parent=1 // pred_fallthru
      _
    // Predicated region
    $region6: #{residual_block.1} parent=1 // pred_check
      _
    $region7: #{residual_block.1} parent=1 // pred_check_branch
      %16 = sbr.rel (0) target = $region9
    $region8: #{residual_block.1} parent=1 // pred_region
      %s18 = ssub.s32 2048, 2048
      %19 = vsyncadd [#allocation3], %s18
      %s20 = sshll.u32 [#allocation2], 4
      %s21 = int_to_ptr.vmem [resolvable:$true] %s20
      %26 = dma.hbm_to_vmem [thread:$0]  %s1, 2048, %s21, [#allocation3], 128, 128, 8
    $region9: #{residual_block.1} parent=1 // pred_fallthru
      _
    // Predicated region
    $region10: #{residual_block.1} parent=1 // pred_check
      _
    $region11: #{residual_block.1} parent=1 // pred_check_branch
      %28 = sbr.rel (0) target = $region13
    $region12: #{residual_block.1} parent=1 // pred_region
      _
    $region13: #{residual_block.1} parent=1 // pred_fallthru
      _
    // Predicated region
    $region14: #{residual_block.1} parent=1 // pred_check
      _
    $region15: #{residual_block.1} parent=1 // pred_check_branch
      %30 = sbr.rel (0) target = $region17
    $region16: #{residual_block.1} parent=1 // pred_region
      %s32 = ssub.s32 1024, 1024
      %33 = vsyncadd [#allocation6], %s32
      %s34 = sshll.u32 [#allocation5], 4
      %s35 = int_to_ptr.vmem [resolvable:$true] %s34
      %40 = dma.hbm_to_vmem [thread:$0]  %s3, 1024, %s35, [#allocation6], 64, 64, 4
    $region17: #{residual_block.1} parent=1 // pred_fallthru
      _
    // Predicated region
    $region18: #{residual_block.1} parent=1 // pred_check
      _
    $region19: #{residual_block.1} parent=1 // pred_check_branch
      %42 = sbr.rel (0) target = $region21
    $region20: #{residual_block.1} parent=1 // pred_region
      _
    $region21: #{residual_block.1} parent=1 // pred_fallthru
      _
    // Predicated region
    $region22: #{residual_block.1} parent=1 // pred_check
      _
    $region23: #{residual_block.1} parent=1 // pred_check_branch
      %44 = sbr.rel (0) target = $region25
    $region24: #{residual_block.1} parent=1 // pred_region
      %45 = dma.done [#allocation3], 2048
    $region25: #{residual_block.1} parent=1 // pred_fallthru
      _
    // Predicated region
    $region26: #{residual_block.1} parent=1 // pred_check
      _
    $region27: #{residual_block.1} parent=1 // pred_check_branch
      %47 = sbr.rel (0) target = $region29
    $region28: #{residual_block.1} parent=1 // pred_region
      %48 = dma.done [#allocation6], 1024
    $region29: #{residual_block.1} parent=1 // pred_fallthru
      _
    %v50 = vld [vmem:[%s0] sm:$0xf]
    %v51 = vld [vmem:[#allocation2] sm:$0xff]
    %v52 = vld [vmem:[#allocation2 + $0x8] sm:$0xff]
    %v53 = vld [vmem:[#allocation2 + $0x10] sm:$0xff]
    %v54 = vld [vmem:[#allocation2 + $0x18] sm:$0xff]
    %v55 = vld [vmem:[#allocation2 + $0x20] sm:$0xff]
    %v56 = vld [vmem:[#allocation2 + $0x28] sm:$0xff]
    %v57 = vld [vmem:[#allocation2 + $0x30] sm:$0xff]
    %v58 = vld [vmem:[#allocation2 + $0x38] sm:$0xff]
    %v59 = vld [vmem:[#allocation2 + $0x40] sm:$0xff]
    %v60 = vld [vmem:[#allocation2 + $0x48] sm:$0xff]
    %v61 = vld [vmem:[#allocation2 + $0x50] sm:$0xff]
    %v62 = vld [vmem:[#allocation2 + $0x58] sm:$0xff]
    %v63 = vld [vmem:[#allocation2 + $0x60] sm:$0xff]
    %v64 = vld [vmem:[#allocation2 + $0x68] sm:$0xff]
    %v65 = vld [vmem:[#allocation2 + $0x70] sm:$0xff]
    %v66 = vld [vmem:[#allocation2 + $0x78] sm:$0xff]
    %v83 = vunpack.c.l.b16 %v51
    %v84 = vunpack.c.h.b16 %v51
    %v85 = vunpack.c.l.b16 %v52
    %v86 = vunpack.c.h.b16 %v52
    %v87 = vunpack.c.l.b16 %v53
    %v88 = vunpack.c.h.b16 %v53
    %v89 = vunpack.c.l.b16 %v54
    %v90 = vunpack.c.h.b16 %v54
    %v91 = vunpack.c.l.b16 %v55
    %v92 = vunpack.c.h.b16 %v55
    %v93 = vunpack.c.l.b16 %v56
    %v94 = vunpack.c.h.b16 %v56
    %v95 = vunpack.c.l.b16 %v57
    %v96 = vunpack.c.h.b16 %v57
    %v97 = vunpack.c.l.b16 %v58
    %v98 = vunpack.c.h.b16 %v58
    %v99 = vunpack.c.l.b16 %v59
    %v100 = vunpack.c.h.b16 %v59
    %v101 = vunpack.c.l.b16 %v60
    %v102 = vunpack.c.h.b16 %v60
    %v103 = vunpack.c.l.b16 %v61
    %v104 = vunpack.c.h.b16 %v61
    %v105 = vunpack.c.l.b16 %v62
    %v106 = vunpack.c.h.b16 %v62
    %v107 = vunpack.c.l.b16 %v63
    %v108 = vunpack.c.h.b16 %v63
    %v109 = vunpack.c.l.b16 %v64
    %v110 = vunpack.c.h.b16 %v64
    %v111 = vunpack.c.l.b16 %v65
    %v112 = vunpack.c.h.b16 %v65
    %v113 = vunpack.c.l.b16 %v66
    %v114 = vunpack.c.h.b16 %v66
    %v115 = vpack.c.b16 %v85, %v83
    %v116 = vpack.c.b16 %v86, %v84
    %v117 = vpack.c.b16 %v89, %v87
    %v118 = vpack.c.b16 %v90, %v88
    %v119 = vpack.c.b16 %v93, %v91
    %v120 = vpack.c.b16 %v94, %v92
    %v121 = vpack.c.b16 %v97, %v95
    %v122 = vpack.c.b16 %v98, %v96
    %v123 = vpack.c.b16 %v101, %v99
    %v124 = vpack.c.b16 %v102, %v100
    %v125 = vpack.c.b16 %v105, %v103
    %v126 = vpack.c.b16 %v106, %v104
    %v127 = vpack.c.b16 %v109, %v107
    %v128 = vpack.c.b16 %v110, %v108
    %v129 = vpack.c.b16 %v113, %v111
    %v130 = vpack.c.b16 %v114, %v112
    %147 = vmatprep.subr.bf16.mxu0 %v116
    %148 = vmatpush1.bf16.msra.mxu0 %v115
    %149 = vmatprep.subr.bf16.mxu0 %v118
    %150 = vmatpush1.bf16.msra.mxu0 %v117
    %151 = vmatprep.subr.bf16.mxu0 %v120
    %152 = vmatpush1.bf16.msra.mxu0 %v119
    %153 = vmatprep.subr.bf16.mxu0 %v122
    %154 = vmatpush1.bf16.msra.mxu0 %v121
    %155 = vmatprep.subr.bf16.mxu0 %v124
    %156 = vmatpush1.bf16.msra.mxu0 %v123
    %157 = vmatprep.subr.bf16.mxu0 %v126
    %158 = vmatpush1.bf16.msra.mxu0 %v125
    %159 = vmatprep.subr.bf16.mxu0 %v128
    %160 = vmatpush1.bf16.msra.mxu0 %v127
    %161 = vmatprep.subr.bf16.mxu0 %v130
    %162 = vmatpush1.bf16.msra.mxu0 %v129
    %163 = vmatprep.subr.bf16.mxu0 0
    %164 = vmatpush1.bf16.msra.mxu0 0
    %165 = vmatprep.subr.bf16.mxu0 0
    %166 = vmatpush1.bf16.msra.mxu0 0
    %167 = vmatprep.subr.bf16.mxu0 0
    %168 = vmatpush1.bf16.msra.mxu0 0
    %169 = vmatprep.subr.bf16.mxu0 0
    %170 = vmatpush1.bf16.msra.mxu0 0
    %171 = vmatprep.subr.bf16.mxu0 0
    %172 = vmatpush1.bf16.msra.mxu0 0
    %173 = vmatprep.subr.bf16.mxu0 0
    %174 = vmatpush1.bf16.msra.mxu0 0
    %175 = vmatprep.subr.bf16.mxu0 0
    %176 = vmatpush1.bf16.msra.mxu0 0
    %177 = vmatprep.subr.bf16.mxu0 0
    %178 = vmatpush1.bf16.msra.mxu0 0
    %179 = vmatprep.mubr.bf16.mxu0 0
    %180 = vmatmul.mubr.bf16.gmra.mrb[0].mxu0 %v50
    %v181 = vpop.f32.mrb[0].mxu0
    %v182 = vadd.f32 0.0, %v181
    %v183 = vpop.f32.mrb[0].mxu0
    %v184 = vadd.f32 0.0, %v183
    %v185 = vpop.f32.mrb[0].mxu0
    %v186 = vpop.f32.mrb[0].mxu0
    %187 = vdwg.mxu0
    %v188 = vld [vmem:[%s2] sm:$0x1]
    %v190 = vlaneseq
    %v191 = vshrl.u32 %v190, 7
    %v192 = vsub.s32 0, %v191
    %v193 = vrot.slane %v188, %v192
    %v195 = vadd.f32 %v182, %v193
    %v196 = vmax.f32 %v195, 0.0
    %v197 = vpack.c.bf16 %v196, %v196
    %v198 = vld [vmem:[#allocation5] sm:$0xf]
    %v199 = vld [vmem:[#allocation5 + $0x4] sm:$0xf]
    %v200 = vld [vmem:[#allocation5 + $0x8] sm:$0xf]
    %v201 = vld [vmem:[#allocation5 + $0xc] sm:$0xf]
    %v202 = vld [vmem:[#allocation5 + $0x10] sm:$0xf]
    %v203 = vld [vmem:[#allocation5 + $0x14] sm:$0xf]
    %v204 = vld [vmem:[#allocation5 + $0x18] sm:$0xf]
    %v205 = vld [vmem:[#allocation5 + $0x1c] sm:$0xf]
    %v206 = vld [vmem:[#allocation5 + $0x20] sm:$0xf]
    %v207 = vld [vmem:[#allocation5 + $0x24] sm:$0xf]
    %v208 = vld [vmem:[#allocation5 + $0x28] sm:$0xf]
    %v209 = vld [vmem:[#allocation5 + $0x2c] sm:$0xf]
    %v210 = vld [vmem:[#allocation5 + $0x30] sm:$0xf]
    %v211 = vld [vmem:[#allocation5 + $0x34] sm:$0xf]
    %v212 = vld [vmem:[#allocation5 + $0x38] sm:$0xf]
    %v213 = vld [vmem:[#allocation5 + $0x3c] sm:$0xf]
    %v214 = vld [vmem:[%s4] sm:$0x1]
    %v216 = vlaneseq
    %v217 = vshrl.u32 %v216, 7
    %v218 = vsub.s32 0, %v217
    %v219 = vrot.slane %v214, %v218
    %v237 = vunpack.c.l.b16 %v198
    %v238 = vunpack.c.l.b16 %v199
    %v239 = vunpack.c.l.b16 %v200
    %v240 = vunpack.c.l.b16 %v201
    %v241 = vunpack.c.l.b16 %v202
    %v242 = vunpack.c.l.b16 %v203
    %v243 = vunpack.c.l.b16 %v204
    %v244 = vunpack.c.l.b16 %v205
    %v245 = vunpack.c.l.b16 %v206
    %v246 = vunpack.c.l.b16 %v207
    %v247 = vunpack.c.l.b16 %v208
    %v248 = vunpack.c.l.b16 %v209
    %v249 = vunpack.c.l.b16 %v210
    %v250 = vunpack.c.l.b16 %v211
    %v251 = vunpack.c.l.b16 %v212
    %v252 = vunpack.c.l.b16 %v213
    %v253 = vpack.c.b16 %v238, %v237
    %v254 = vpack.c.b16 %v240, %v239
    %v255 = vpack.c.b16 %v242, %v241
    %v256 = vpack.c.b16 %v244, %v243
    %v257 = vpack.c.b16 %v246, %v245
    %v258 = vpack.c.b16 %v248, %v247
    %v259 = vpack.c.b16 %v250, %v249
    %v260 = vpack.c.b16 %v252, %v251
    %269 = vmatprep.subr.bf16.mxu0 0
    %270 = vmatpush1.bf16.msra.mxu0 %v253
    %271 = vmatprep.subr.bf16.mxu0 0
    %272 = vmatpush1.bf16.msra.mxu0 %v254
    %273 = vmatprep.subr.bf16.mxu0 0
    %274 = vmatpush1.bf16.msra.mxu0 %v255
    %275 = vmatprep.subr.bf16.mxu0 0
    %276 = vmatpush1.bf16.msra.mxu0 %v256
    %277 = vmatprep.subr.bf16.mxu0 0
    %278 = vmatpush1.bf16.msra.mxu0 %v257
    %279 = vmatprep.subr.bf16.mxu0 0
    %280 = vmatpush1.bf16.msra.mxu0 %v258
    %281 = vmatprep.subr.bf16.mxu0 0
    %282 = vmatpush1.bf16.msra.mxu0 %v259
    %283 = vmatprep.subr.bf16.mxu0 0
    %284 = vmatpush1.bf16.msra.mxu0 %v260
    %285 = vmatprep.subr.bf16.mxu0 0
    %286 = vmatpush1.bf16.msra.mxu0 0
    %287 = vmatprep.subr.bf16.mxu0 0
    %288 = vmatpush1.bf16.msra.mxu0 0
    %289 = vmatprep.subr.bf16.mxu0 0
    %290 = vmatpush1.bf16.msra.mxu0 0
    %291 = vmatprep.subr.bf16.mxu0 0
    %292 = vmatpush1.bf16.msra.mxu0 0
    %293 = vmatprep.subr.bf16.mxu0 0
    %294 = vmatpush1.bf16.msra.mxu0 0
    %295 = vmatprep.subr.bf16.mxu0 0
    %296 = vmatpush1.bf16.msra.mxu0 0
    %297 = vmatprep.subr.bf16.mxu0 0
    %298 = vmatpush1.bf16.msra.mxu0 0
    %299 = vmatprep.subr.bf16.mxu0 0
    %300 = vmatpush1.bf16.msra.mxu0 0
    %301 = vmatprep.mubr.bf16.mxu0 0
    %302 = vmatmul.mubr.bf16.gmra.mrb[0].mxu0 %v197
    %v303 = vpop.f32.mrb[0].mxu0
    %v304 = vadd.f32 %v219, %v303
    %v305 = vpop.f32.mrb[0].mxu0
    %v306 = vpop.f32.mrb[0].mxu0
    %v307 = vpop.f32.mrb[0].mxu0
    %308 = vdwg.mxu0
    %v309 = vadd.f32 %v304, %v184
    %v310 = vmax.f32 %v309, 0.0
    %311 = vst [vmem:[#allocation7] sm:$0xff] %v310
    // Predicated region
    $region30: #{residual_block.1} parent=1 // pred_check
      _
    $region31: #{residual_block.1} parent=1 // pred_check_branch
      %313 = sbr.rel (0) target = $region33
    $region32: #{residual_block.1} parent=1 // pred_region
      %s315 = ssub.s32 128, 128
      %316 = vsyncadd [#allocation4], %s315
      %s318 = sshll.u32 [#allocation7], 4
      %s319 = int_to_ptr.vmem [resolvable:$true] %s318
      %321 = dma.vmem_to_hbm [thread:$0]  %s319, 128, %s5, [#allocation4]
    $region33: #{residual_block.1} parent=1 // pred_fallthru
      _
    // Predicated region
    $region34: #{residual_block.1} parent=1 // pred_check
      _
    $region35: #{residual_block.1} parent=1 // pred_check_branch
      %323 = sbr.rel (0) target = $region37
    $region36: #{residual_block.1} parent=1 // pred_region
      %324 = dma.done [#allocation4], 128
    $region37: #{residual_block.1} parent=1 // pred_fallthru
      _
    %325 = vsyncpa [#allocation3], 1
    %326 = vsyncpa [#allocation6], 1
    %327 = vsyncpa [#allocation4], 1

</llo_original>
